<compile_context>
chip_gen: v7x
topology: tpu7x:2x2x1
jax: 0.10.0
libtpu: 0.0.40
codegen_flags: <defaults>
</compile_context>

<pallas_src>
import jax
import jax.numpy as jnp
from jax.experimental import pallas as pl
from jax.experimental.pallas import tpu as pltpu


def _round_up(n: int, m: int) -> int:
    return ((n + m - 1) // m) * m


def _pick_tb(B: int, tb_cap: int = 512) -> int:
    """Batch tile: >=2 grid steps when B allows, multiple of 8, capped for VMEM."""
    half = _round_up(max((B + 1) // 2, 8), 8)
    return min(tb_cap, half)


# ------------------------------------------------------------------ kernel ---

def _qlayer_kernel(rho_ref, ca_ref, cb_ref, k_ref, erow_ref, ecol_ref,
                   eyemask_ref, eyeadd_ref, out_ref):
    """One grid step == TB batch elements, everything in packed (TB, d*d) layout.

    rho_ref     : (TB, d2)      packed density matrices (lane dense)
    ca_ref      : (TB, d)       Givens cos coefficients, scaled by sqrt(1-p)
    cb_ref      : (TB, d)       signed Givens sin coefficients, scaled by sqrt(1-p)
    k_ref       : (d2, 4*d2)    [kron(Q,Q), kron(PQ,Q), kron(Q,PQ), kron(PQ,PQ)]^T
    erow_ref    : (d, d2)       0/1 row-expansion matrix   (coef[r] -> lanes of row r)
    ecol_ref    : (d, d2)       0/1 column-expansion matrix (coef[c] -> lanes of col c)
    eyemask_ref : (1, d2)       flattened identity (diagonal-lane mask)
    eyeadd_ref  : (1, d2)       (p/d) * flattened identity
    out_ref     : (TB, d2)      packed output (lane dense)

    out = (sqrt(1-p) R) (Q rho Q^T) (sqrt(1-p) R)^T + (p/d) tr(rho) I
        = (1-p) U rho U^T + (p/d) tr(rho) I,    U = R Q.
    """
    d2 = rho_ref.shape[1]
    rho = rho_ref[...]                                     # (TB, d2)

    # One weight-stationary MXU contraction -> S and its pair-partner permutations.
    s_all = jnp.dot(rho, k_ref[...], preferred_element_type=jnp.float32)  # (TB, 4*d2)
    s    = s_all[:, 0 * d2:1 * d2]       # S   = Q rho Q^T
    s_r  = s_all[:, 1 * d2:2 * d2]       # P S      (row-pair partner)
    s_c  = s_all[:, 2 * d2:3 * d2]       # S P      (column-pair partner)
    s_rc = s_all[:, 3 * d2:4 * d2]       # P S P

    # Expand the compact per-element Givens coefficients to the packed layout
    # with tiny constant 0/1 matmuls (lane-aligned, no reshapes/relayouts).
    ca = ca_ref[...]                                       # (TB, d)
    cb = cb_ref[...]                                       # (TB, d)
    erow = erow_ref[...]
    ecol = ecol_ref[...]
    ca_row = jnp.dot(ca, erow, preferred_element_type=jnp.float32)  # (TB, d2)
    cb_row = jnp.dot(cb, erow, preferred_element_type=jnp.float32)
    ca_col = jnp.dot(ca, ecol, preferred_element_type=jnp.float32)
    cb_col = jnp.dot(cb, ecol, preferred_element_type=jnp.float32)

    # Data-dependent Givens sandwich R S R^T, entirely in packed layout (VPU).
    t       = ca_row * s + cb_row * s_r          # T   = R S
    tp      = ca_row * s_c + cb_row * s_rc       # T P = R (S P)   (column partner of T)
    evolved = ca_col * t + cb_col * tp           # (1-p) * U rho U^T, packed

    # Depolarizing channel: + (p/d) tr(rho) I ; trace via masked lane reduce (XLU).
    tr = jnp.sum(rho * eyemask_ref[...], axis=1, keepdims=True)     # (TB, 1)
    out_ref[...] = (evolved + tr * eyeadd_ref[...]).astype(out_ref.dtype)


def qlayer_apply(rho, ca, cb, kcat_t, e_row, e_col, eye_mask, eye_add,
                 *, tb_cap: int = 512):
    """Batched rho' = (1-p) U rho U^T + (p/d) tr(rho) I via one Pallas kernel."""
    B, d, _ = rho.shape
    d2 = d * d
    assert kcat_t.shape == (d2, 4 * d2)

    rho_packed = rho.reshape(B, d2).astype(jnp.float32)
    ca = ca.astype(jnp.float32)
    cb = cb.astype(jnp.float32)

    TB = _pick_tb(B, tb_cap)
    Bp = _round_up(B, TB)
    if Bp != B:
        pad = ((0, Bp - B), (0, 0))
        rho_packed = jnp.pad(rho_packed, pad)
        ca = jnp.pad(ca, pad)
        cb = jnp.pad(cb, pad)

    out = pl.pallas_call(
        _qlayer_kernel,
        out_shape=jax.ShapeDtypeStruct((Bp, d2), jnp.float32),
        grid=(Bp // TB,),
        in_specs=[
            pl.BlockSpec((TB, d2), lambda b: (b, 0)),        # rho (packed, lane dense)
            pl.BlockSpec((TB, d), lambda b: (b, 0)),         # cos coefficients
            pl.BlockSpec((TB, d), lambda b: (b, 0)),         # signed sin coefficients
            pl.BlockSpec((d2, 4 * d2), lambda b: (0, 0)),    # kron blocks (weight-stationary)
            pl.BlockSpec((d, d2), lambda b: (0, 0)),         # row-expansion constant
            pl.BlockSpec((d, d2), lambda b: (0, 0)),         # column-expansion constant
            pl.BlockSpec((1, d2), lambda b: (0, 0)),         # flattened identity (trace mask)
            pl.BlockSpec((1, d2), lambda b: (0, 0)),         # (p/d) * flattened identity
        ],
        out_specs=pl.BlockSpec((TB, d2), lambda b: (b, 0)),
        compiler_params=pltpu.CompilerParams(
            dimension_semantics=("parallel",),
            vmem_limit_bytes=32 * 1024 * 1024),
    )(rho_packed, ca, cb, kcat_t, e_row, e_col, eye_mask, eye_add)

    return out[:B].reshape(B, d, d)


# ------------------------------------------------------- parameter "upload" ---

def init_parameters(D: int, d: int):
    """Deterministic parameter init (QLayerBase.init_parameters analog)."""
    k = jax.random.PRNGKey(1234)
    kw, kq = jax.random.split(k)
    W = 0.1 * jax.random.normal(kw, (D, d // 2), dtype=jnp.float32)
    A = jax.random.normal(kq, (d, d), dtype=jnp.float32)
    Q, _ = jnp.linalg.qr(A)
    return W, Q.astype(jnp.float32)


def upload_parameters(x, W, Q, p_depol):
    """Upload x: compact Givens coefficients, with sqrt(1-p) and signs folded in.

    U(x_b) = R(theta_b) @ Q with theta_b = x_b @ W, so
      U[b, 2m]   =  c[b,m] Q[2m] - s[b,m] Q[2m+1]
      U[b, 2m+1] =  s[b,m] Q[2m] + c[b,m] Q[2m+1]
    """
    d = Q.shape[0]
    theta = x.astype(jnp.float32) @ W                       # (B, d//2)
    scale = jnp.sqrt(1.0 - p_depol).astype(jnp.float32)
    c = jnp.cos(theta) * scale
    s = jnp.sin(theta) * scale
    ca = jnp.repeat(c, 2, axis=1)                           # [c0, c0, c1, c1, ...]
    sign = jnp.tile(jnp.array([-1.0, 1.0], dtype=jnp.float32), d // 2)
    cb = jnp.repeat(s, 2, axis=1) * sign                    # [-s0, s0, -s1, s1, ...]
    return ca, cb


def build_layer_constants(Q, p_depol):
    """Shared, data-independent constants: kron blocks, expansion matrices, identity."""
    d = Q.shape[0]
    d2 = d * d
    perm = jnp.arange(d).reshape(-1, 2)[:, ::-1].reshape(-1)
    Qp = Q[perm, :]                                         # P @ Q (row pairs swapped)
    k1 = jnp.kron(Q, Q)                                     # vec(Q rho Q^T)
    k2 = jnp.kron(Qp, Q)                                    # vec(P S)
    k3 = jnp.kron(Q, Qp)                                    # vec(S P)
    k4 = jnp.kron(Qp, Qp)                                   # vec(P S P)
    kcat_t = jnp.concatenate([k1.T, k2.T, k3.T, k4.T], axis=1)   # (d2, 4*d2)
    eye = jnp.eye(d, dtype=jnp.float32)
    e_row = jnp.repeat(eye, d, axis=1)                      # coef[r] -> lanes of row r
    e_col = jnp.tile(eye, (1, d))                           # coef[c] -> lanes of col c
    eye_mask = eye.reshape(1, d2)
    eye_add = (p_depol / d) * eye_mask
    return kcat_t.astype(jnp.float32), e_row, e_col, eye_mask, eye_add.astype(jnp.float32)


def qlayer_forward(rho, x, W, Q, p_depol=0.05):
    """QLayerBase.forward(rho, x) — concrete realization."""
    ca, cb = upload_parameters(x, W, Q, p_depol)            # data upload (glue)
    kcat_t, e_row, e_col, eye_mask, eye_add = build_layer_constants(Q, p_depol)
    return qlayer_apply(rho, ca, cb, kcat_t, e_row, e_col, eye_mask, eye_add)


# ------------------------------------------------------------ plain-JAX ref ---

def build_operator_reference(x, W, Q):
    """Dense U(x_b) = R(theta_b) @ Q (reference / testing only)."""
    d = Q.shape[0]
    theta = x.astype(jnp.float32) @ W
    c, s = jnp.cos(theta), jnp.sin(theta)
    Qe, Qo = Q[0::2], Q[1::2]                                    # (d//2, d)
    Ue = c[:, :, None] * Qe[None] - s[:, :, None] * Qo[None]
    Uo = s[:, :, None] * Qe[None] + c[:, :, None] * Qo[None]
    return jnp.stack([Ue, Uo], axis=2).reshape(-1, d, d)


# ---------------------------------------------------------------------- main --

if __name__ == "__main__":
    B, D, d = 2, 4, 16   # batch, data dimensionality, Hilbert-space dim (4 "qubits")
    p_depol = 0.05

    key = jax.random.PRNGKey(0)
    kx, kr = jax.random.split(key)

    x = jax.random.normal(kx, (B, D), dtype=jnp.float32)

    # Valid (real, symmetric, PSD, trace-1) density matrices.
    A = jax.random.normal(kr, (B, d, d), dtype=jnp.float32)
    rho = jnp.einsum("bij,bkj->bik", A, A)
    rho = rho / jnp.trace(rho, axis1=-2, axis2=-1)[:, None, None]

    W, Q = init_parameters(D, d)

    out = qlayer_forward(rho, x, W, Q, p_depol)
    out = jax.block_until_ready(out)

    # Plain-JAX reference for sanity.
    U = build_operator_reference(x, W, Q)
    tr = jnp.trace(rho, axis1=-2, axis2=-1)
    ref = ((1.0 - p_depol) * jnp.einsum("bij,bjk,blk->bil", U, rho, U,
                                        precision=jax.lax.Precision.HIGHEST)
           + (p_depol / d) * tr[:, None, None] * jnp.eye(d, dtype=jnp.float32)[None])

    assert out.shape == (B, d, d)
    err = float(jnp.max(jnp.abs(out - ref)))
    assert jnp.allclose(out, ref, atol=1e-3, rtol=1e-2), f"max abs err {err}"

    print("KERNEL_OK")
</pallas_src>

<mosaic_0001>
module attributes {stable_mosaic.version = 11 : i64} {
  func.func @_qlayer_kernel(%arg0: i32, %arg1: memref<8x256xf32, #tpu.memory_space<vmem>>, %arg2: memref<8x16xf32, #tpu.memory_space<vmem>>, %arg3: memref<8x16xf32, #tpu.memory_space<vmem>>, %arg4: memref<256x1024xf32, #tpu.memory_space<vmem>>, %arg5: memref<16x256xf32, #tpu.memory_space<vmem>>, %arg6: memref<16x256xf32, #tpu.memory_space<vmem>>, %arg7: memref<1x256xf32, #tpu.memory_space<vmem>>, %arg8: memref<1x256xf32, #tpu.memory_space<vmem>>, %arg9: memref<8x256xf32, #tpu.memory_space<vmem>>) attributes {dimension_semantics = [#tpu.dimension_semantics<parallel>], iteration_bounds = array<i64: 1>, scalar_prefetch = 0 : i64, scratch_operands = 0 : i64, tpu.core_type = #tpu.core_type<tc>, window_params = [{transform_indices = @transform_0, window_bounds = array<i64: 8, 256>}, {transform_indices = @transform_1, window_bounds = array<i64: 8, 16>}, {transform_indices = @transform_2, window_bounds = array<i64: 8, 16>}, {pipeline_mode = #tpu.pipeline_mode<synchronous>, transform_indices = @transform_3, window_bounds = array<i64: 256, 1024>}, {pipeline_mode = #tpu.pipeline_mode<synchronous>, transform_indices = @transform_4, window_bounds = array<i64: 16, 256>}, {pipeline_mode = #tpu.pipeline_mode<synchronous>, transform_indices = @transform_5, window_bounds = array<i64: 16, 256>}, {pipeline_mode = #tpu.pipeline_mode<synchronous>, transform_indices = @transform_6, window_bounds = array<i64: 1, 256>}, {pipeline_mode = #tpu.pipeline_mode<synchronous>, transform_indices = @transform_7, window_bounds = array<i64: 1, 256>}, {transform_indices = @transform_8, window_bounds = array<i64: 8, 256>}]} {
    %c0 = arith.constant 0 : index
    %c0_0 = arith.constant 0 : index
    %0 = vector.load %arg1[%c0, %c0_0] : memref<8x256xf32, #tpu.memory_space<vmem>>, vector<8x256xf32>
    %c0_1 = arith.constant 0 : index
    %c0_2 = arith.constant 0 : index
    %1 = vector.load %arg4[%c0_1, %c0_2] : memref<256x1024xf32, #tpu.memory_space<vmem>>, vector<256x1024xf32>
    %cst = arith.constant dense<0.000000e+00> : vector<8x1024xf32>
    %2 = tpu.matmul %0, %1, %cst {dimension_numbers = #tpu.dot_dimension_numbers<[1], [0], [0], [1], [0, 0, 1, 1], [], []>} : vector<8x256xf32>, vector<256x1024xf32>, vector<8x1024xf32> -> vector<8x1024xf32>
    %3 = vector.extract_strided_slice %2 {offsets = [0, 0], sizes = [8, 256], strides = [1, 1]} : vector<8x1024xf32> to vector<8x256xf32>
    %4 = vector.extract_strided_slice %2 {offsets = [0, 256], sizes = [8, 256], strides = [1, 1]} : vector<8x1024xf32> to vector<8x256xf32>
    %5 = vector.extract_strided_slice %2 {offsets = [0, 512], sizes = [8, 256], strides = [1, 1]} : vector<8x1024xf32> to vector<8x256xf32>
    %6 = vector.extract_strided_slice %2 {offsets = [0, 768], sizes = [8, 256], strides = [1, 1]} : vector<8x1024xf32> to vector<8x256xf32>
    %c0_3 = arith.constant 0 : index
    %c0_4 = arith.constant 0 : index
    %7 = vector.load %arg2[%c0_3, %c0_4] : memref<8x16xf32, #tpu.memory_space<vmem>>, vector<8x16xf32>
    %c0_5 = arith.constant 0 : index
    %c0_6 = arith.constant 0 : index
    %8 = vector.load %arg3[%c0_5, %c0_6] : memref<8x16xf32, #tpu.memory_space<vmem>>, vector<8x16xf32>
    %c0_7 = arith.constant 0 : index
    %c0_8 = arith.constant 0 : index
    %9 = vector.load %arg5[%c0_7, %c0_8] : memref<16x256xf32, #tpu.memory_space<vmem>>, vector<16x256xf32>
    %c0_9 = arith.constant 0 : index
    %c0_10 = arith.constant 0 : index
    %10 = vector.load %arg6[%c0_9, %c0_10] : memref<16x256xf32, #tpu.memory_space<vmem>>, vector<16x256xf32>
    %cst_11 = arith.constant dense<0.000000e+00> : vector<8x256xf32>
    %11 = tpu.matmul %7, %9, %cst_11 {dimension_numbers = #tpu.dot_dimension_numbers<[1], [0], [0], [1], [0, 0, 1, 1], [], []>} : vector<8x16xf32>, vector<16x256xf32>, vector<8x256xf32> -> vector<8x256xf32>
    %cst_12 = arith.constant dense<0.000000e+00> : vector<8x256xf32>
    %12 = tpu.matmul %8, %9, %cst_12 {dimension_numbers = #tpu.dot_dimension_numbers<[1], [0], [0], [1], [0, 0, 1, 1], [], []>} : vector<8x16xf32>, vector<16x256xf32>, vector<8x256xf32> -> vector<8x256xf32>
    %cst_13 = arith.constant dense<0.000000e+00> : vector<8x256xf32>
    %13 = tpu.matmul %7, %10, %cst_13 {dimension_numbers = #tpu.dot_dimension_numbers<[1], [0], [0], [1], [0, 0, 1, 1], [], []>} : vector<8x16xf32>, vector<16x256xf32>, vector<8x256xf32> -> vector<8x256xf32>
    %cst_14 = arith.constant dense<0.000000e+00> : vector<8x256xf32>
    %14 = tpu.matmul %8, %10, %cst_14 {dimension_numbers = #tpu.dot_dimension_numbers<[1], [0], [0], [1], [0, 0, 1, 1], [], []>} : vector<8x16xf32>, vector<16x256xf32>, vector<8x256xf32> -> vector<8x256xf32>
    %15 = arith.mulf %11, %3 : vector<8x256xf32>
    %16 = arith.mulf %12, %4 : vector<8x256xf32>
    %17 = arith.addf %15, %16 : vector<8x256xf32>
    %18 = arith.mulf %11, %5 : vector<8x256xf32>
    %19 = arith.mulf %12, %6 : vector<8x256xf32>
    %20 = arith.addf %18, %19 : vector<8x256xf32>
    %21 = arith.mulf %13, %17 : vector<8x256xf32>
    %22 = arith.mulf %14, %20 : vector<8x256xf32>
    %23 = arith.addf %21, %22 : vector<8x256xf32>
    %c0_15 = arith.constant 0 : index
    %c0_16 = arith.constant 0 : index
    %24 = vector.load %arg7[%c0_15, %c0_16] : memref<1x256xf32, #tpu.memory_space<vmem>>, vector<1x256xf32>
    %25 = vector.broadcast %24 : vector<1x256xf32> to vector<8x256xf32>
    %26 = arith.mulf %0, %25 : vector<8x256xf32>
    %cst_17 = arith.constant dense<0.000000e+00> : vector<8xf32>
    %27 = vector.multi_reduction <add>, %26, %cst_17 [1] : vector<8x256xf32> to vector<8xf32>
    %28 = vector.shape_cast %27 : vector<8xf32> to vector<8x1xf32>
    %c0_18 = arith.constant 0 : index
    %c0_19 = arith.constant 0 : index
    %29 = vector.load %arg8[%c0_18, %c0_19] : memref<1x256xf32, #tpu.memory_space<vmem>>, vector<1x256xf32>
    %30 = vector.broadcast %28 : vector<8x1xf32> to vector<8x256xf32>
    %31 = vector.broadcast %29 : vector<1x256xf32> to vector<8x256xf32>
    %32 = arith.mulf %30, %31 : vector<8x256xf32>
    %33 = arith.addf %23, %32 : vector<8x256xf32>
    %c0_20 = arith.constant 0 : index
    %c0_21 = arith.constant 0 : index
    %34 = vector.load %arg9[%c0_20, %c0_21] : memref<8x256xf32, #tpu.memory_space<vmem>>, vector<8x256xf32>
    tpu.vector_store %arg9[%c0_20, %c0_21], %33 {strides = array<i32>} : memref<8x256xf32, #tpu.memory_space<vmem>>, vector<8x256xf32>,
    return
  }
  func.func @transform_0(%arg0: i32) -> (i32, i32) {
    %c0_i32 = arith.constant 0 : i32
    %c0_i32_0 = arith.constant 0 : i32
    return %arg0, %c0_i32 : i32, i32
  }
  func.func @transform_1(%arg0: i32) -> (i32, i32) {
    %c0_i32 = arith.constant 0 : i32
    %c0_i32_0 = arith.constant 0 : i32
    return %arg0, %c0_i32 : i32, i32
  }
  func.func @transform_2(%arg0: i32) -> (i32, i32) {
    %c0_i32 = arith.constant 0 : i32
    %c0_i32_0 = arith.constant 0 : i32
    return %arg0, %c0_i32 : i32, i32
  }
  func.func @transform_3(%arg0: i32) -> (i32, i32) {
    %c0_i32 = arith.constant 0 : i32
    %c0_i32_0 = arith.constant 0 : i32
    %c0_i32_1 = arith.constant 0 : i32
    return %c0_i32, %c0_i32_0 : i32, i32
  }
  func.func @transform_4(%arg0: i32) -> (i32, i32) {
    %c0_i32 = arith.constant 0 : i32
    %c0_i32_0 = arith.constant 0 : i32
    %c0_i32_1 = arith.constant 0 : i32
    return %c0_i32, %c0_i32_0 : i32, i32
  }
  func.func @transform_5(%arg0: i32) -> (i32, i32) {
    %c0_i32 = arith.constant 0 : i32
    %c0_i32_0 = arith.constant 0 : i32
    %c0_i32_1 = arith.constant 0 : i32
    return %c0_i32, %c0_i32_0 : i32, i32
  }
  func.func @transform_6(%arg0: i32) -> (i32, i32) {
    %c0_i32 = arith.constant 0 : i32
    %c0_i32_0 = arith.constant 0 : i32
    %c0_i32_1 = arith.constant 0 : i32
    return %c0_i32, %c0_i32_0 : i32, i32
  }
  func.func @transform_7(%arg0: i32) -> (i32, i32) {
    %c0_i32 = arith.constant 0 : i32
    %c0_i32_0 = arith.constant 0 : i32
    %c0_i32_1 = arith.constant 0 : i32
    return %c0_i32, %c0_i32_0 : i32, i32
  }
  func.func @transform_8(%arg0: i32) -> (i32, i32) {
    %c0_i32 = arith.constant 0 : i32
    %c0_i32_0 = arith.constant 0 : i32
    return %arg0, %c0_i32 : i32, i32
  }
}

</mosaic_0001>

<llo_original>
// kernel: tpu_custom_call.1
$region0: #{tpu_custom_call.1}
  #allocation0 [shape = 'u32[]', space=smem, size = 0x4, offset = 0x4, fixed_abs, tag = 'smem constant byte address 0x4 - core index']
  #allocation1 [shape = 'u32[144,128]{1,0:T(1,128)}', space=vmem, size = 0x12000, scoped, tag = 'internal scratch']
  %s0 = inlined_call_operand.hbm [shape: f32[8,256], index: 0, kind: input, shape index: {}]
  %s1 = inlined_call_operand.hbm [shape: f32[8,16], index: 1, kind: input, shape index: {}]
  %s2 = inlined_call_operand.hbm [shape: f32[8,16], index: 2, kind: input, shape index: {}]
  %s3 = inlined_call_operand.hbm [shape: f32[256,1024], index: 3, kind: input, shape index: {}]
  %s4 = inlined_call_operand.hbm [shape: f32[16,256], index: 4, kind: input, shape index: {}]
  %s5 = inlined_call_operand.hbm [shape: f32[16,256], index: 5, kind: input, shape index: {}]
  %s6 = inlined_call_operand.vmem [shape: f32[1,256], index: 6, kind: input, shape index: {}]
  %s7 = inlined_call_operand.vmem [shape: f32[1,256], index: 7, kind: input, shape index: {}]
  %s8 = inlined_call_operand.hbm [shape: f32[8,256], index: 8, kind: output, shape index: {}]
  %s9 = sld [smem:[#allocation0]]
  $region66: #{tpu_custom_call.1} parent=0
    _
  %s11 = ssub.s32 1, %s9
  %s12 = scalar_select 0, %s11, %s9
  $region1: #{tpu_custom_call.1} parent=0
    #allocation2 [shape = 'u8[8192]{0}', space=vmem, size = 0x2000, scoped, tag = 'input window, operand 0, single buffered']
    #allocation3 [shape = 's32[1]{0}', space=sflag, size = 0x4, scoped, tag = 'scoped memory for tpu_custom_call.1']
    #allocation4 [shape = 's32[1]{0}', space=sflag, size = 0x4, scoped, tag = 'scoped memory for tpu_custom_call.1']
    #allocation5 [shape = 'u8[4096]{0}', space=vmem, size = 0x1000, scoped, tag = 'input window, operand 1, single buffered']
    #allocation6 [shape = 's32[1]{0}', space=sflag, size = 0x4, scoped, tag = 'scoped memory for tpu_custom_call.1']
    #allocation7 [shape = 'u8[4096]{0}', space=vmem, size = 0x1000, scoped, tag = 'input window, operand 2, single buffered']
    #allocation8 [shape = 'u8[1048576]{0}', space=vmem, size = 0x100000, scoped, tag = 'input window, operand 3, single buffered']
    #allocation9 [shape = 's32[1]{0}', space=sflag, size = 0x4, scoped, tag = 'scoped memory for tpu_custom_call.1']
    #allocation10 [shape = 'u8[16384]{0}', space=vmem, size = 0x4000, scoped, tag = 'input window, operand 4, single buffered']
    #allocation11 [shape = 'u8[16384]{0}', space=vmem, size = 0x4000, scoped, tag = 'input window, operand 5, single buffered']
    #allocation12 [shape = 's32[1]{0}', space=sflag, size = 0x4, scoped, tag = 'scoped memory for tpu_custom_call.1']
    #allocation13 [shape = 'u8[8192]{0}', space=vmem, size = 0x2000, scoped, tag = 'output window, operand 0, single buffered']
    %13 = vsyncpa [#allocation3], 0
    %14 = vsyncpa [#allocation6], 0
    %15 = vsyncpa [#allocation9], 0
    %16 = vsyncpa [#allocation12], 0
    %17 = vsyncpa [#allocation4], 0
    // Predicated region
    $region2: #{tpu_custom_call.1} parent=1 // pred_check
      _
    $region3: #{tpu_custom_call.1} parent=1 // pred_check_branch
      %19 = sbr.rel (0) target = $region5
    $region4: #{tpu_custom_call.1} parent=1 // pred_region
      %s21 = ssub.s32 256, 256
      %22 = vsyncadd [#allocation3], %s21
      %s24 = sshll.u32 [#allocation2], 4
      %s25 = int_to_ptr.vmem [resolvable:$true] %s24
      %27 = dma.hbm_to_vmem [thread:$0]  %s0, 256, %s25, [#allocation3]
    $region5: #{tpu_custom_call.1} parent=1 // pred_fallthru
      _
    // Predicated region
    $region6: #{tpu_custom_call.1} parent=1 // pred_check
      _
    $region7: #{tpu_custom_call.1} parent=1 // pred_check_branch
      %29 = sbr.rel (0) target = $region9
    $region8: #{tpu_custom_call.1} parent=1 // pred_region
      %s31 = ssub.s32 128, 128
      %32 = vsyncadd [#allocation6], %s31
      %s34 = sshll.u32 [#allocation5], 4
      %s35 = int_to_ptr.vmem [resolvable:$true] %s34
      %37 = dma.hbm_to_vmem [thread:$0]  %s1, 128, %s35, [#allocation6]
    $region9: #{tpu_custom_call.1} parent=1 // pred_fallthru
      _
    // Predicated region
    $region10: #{tpu_custom_call.1} parent=1 // pred_check
      _
    $region11: #{tpu_custom_call.1} parent=1 // pred_check_branch
      %39 = sbr.rel (0) target = $region13
    $region12: #{tpu_custom_call.1} parent=1 // pred_region
      %s41 = ssub.s32 128, 128
      %42 = vsyncadd [#allocation6], %s41
      %s44 = sshll.u32 [#allocation7], 4
      %s45 = int_to_ptr.vmem [resolvable:$true] %s44
      %47 = dma.hbm_to_vmem [thread:$0]  %s2, 128, %s45, [#allocation6]
    $region13: #{tpu_custom_call.1} parent=1 // pred_fallthru
      _
    // Predicated region
    $region14: #{tpu_custom_call.1} parent=1 // pred_check
      _
    $region15: #{tpu_custom_call.1} parent=1 // pred_check_branch
      %49 = sbr.rel (0) target = $region17
    $region16: #{tpu_custom_call.1} parent=1 // pred_region
      %s51 = ssub.s32 32768, 32768
      %52 = vsyncadd [#allocation9], %s51
      %s53 = sshll.u32 [#allocation8], 4
      %s54 = int_to_ptr.vmem [resolvable:$true] %s53
      %59 = dma.hbm_to_vmem [thread:$0]  %s3, 32768, %s54, [#allocation9], 1024, 1024, 64
    $region17: #{tpu_custom_call.1} parent=1 // pred_fallthru
      _
    // Predicated region
    $region18: #{tpu_custom_call.1} parent=1 // pred_check
      _
    $region19: #{tpu_custom_call.1} parent=1 // pred_check_branch
      %61 = sbr.rel (0) target = $region21
    $region20: #{tpu_custom_call.1} parent=1 // pred_region
      %s63 = ssub.s32 512, 512
      %64 = vsyncadd [#allocation9], %s63
      %s65 = sshll.u32 [#allocation10], 4
      %s66 = int_to_ptr.vmem [resolvable:$true] %s65
      %71 = dma.hbm_to_vmem [thread:$0]  %s4, 512, %s66, [#allocation9], 256, 256, 16
    $region21: #{tpu_custom_call.1} parent=1 // pred_fallthru
      _
    // Predicated region
    $region22: #{tpu_custom_call.1} parent=1 // pred_check
      _
    $region23: #{tpu_custom_call.1} parent=1 // pred_check_branch
      %73 = sbr.rel (0) target = $region25
    $region24: #{tpu_custom_call.1} parent=1 // pred_region
      %s75 = ssub.s32 512, 512
      %76 = vsyncadd [#allocation12], %s75
      %s77 = sshll.u32 [#allocation11], 4
      %s78 = int_to_ptr.vmem [resolvable:$true] %s77
      %83 = dma.hbm_to_vmem [thread:$0]  %s5, 512, %s78, [#allocation12], 256, 256, 16
    $region25: #{tpu_custom_call.1} parent=1 // pred_fallthru
      _
    // Predicated region
    $region26: #{tpu_custom_call.1} parent=1 // pred_check
      _
    $region27: #{tpu_custom_call.1} parent=1 // pred_check_branch
      %85 = sbr.rel (0) target = $region29
    $region28: #{tpu_custom_call.1} parent=1 // pred_region
      _
    $region29: #{tpu_custom_call.1} parent=1 // pred_fallthru
      _
    // Predicated region
    $region30: #{tpu_custom_call.1} parent=1 // pred_check
      _
    $region31: #{tpu_custom_call.1} parent=1 // pred_check_branch
      %87 = sbr.rel (0) target = $region33
    $region32: #{tpu_custom_call.1} parent=1 // pred_region
      _
    $region33: #{tpu_custom_call.1} parent=1 // pred_fallthru
      _
    // Predicated region
    $region34: #{tpu_custom_call.1} parent=1 // pred_check
      _
    $region35: #{tpu_custom_call.1} parent=1 // pred_check_branch
      %89 = sbr.rel (0) target = $region37
    $region36: #{tpu_custom_call.1} parent=1 // pred_region
      %90 = dma.done [#allocation3], 256
    $region37: #{tpu_custom_call.1} parent=1 // pred_fallthru
      _
    // Predicated region
    $region38: #{tpu_custom_call.1} parent=1 // pred_check
      _
    $region39: #{tpu_custom_call.1} parent=1 // pred_check_branch
      %92 = sbr.rel (0) target = $region41
    $region40: #{tpu_custom_call.1} parent=1 // pred_region
      %93 = dma.done [#allocation6], 128
    $region41: #{tpu_custom_call.1} parent=1 // pred_fallthru
      _
    // Predicated region
    $region42: #{tpu_custom_call.1} parent=1 // pred_check
      _
    $region43: #{tpu_custom_call.1} parent=1 // pred_check_branch
      %95 = sbr.rel (0) target = $region45
    $region44: #{tpu_custom_call.1} parent=1 // pred_region
      %96 = dma.done [#allocation6], 128
    $region45: #{tpu_custom_call.1} parent=1 // pred_fallthru
      _
    // Predicated region
    $region46: #{tpu_custom_call.1} parent=1 // pred_check
      _
    $region47: #{tpu_custom_call.1} parent=1 // pred_check_branch
      %98 = sbr.rel (0) target = $region49
    $region48: #{tpu_custom_call.1} parent=1 // pred_region
      %99 = dma.done [#allocation9], 32768
    $region49: #{tpu_custom_call.1} parent=1 // pred_fallthru
      _
    // Predicated region
    $region50: #{tpu_custom_call.1} parent=1 // pred_check
      _
    $region51: #{tpu_custom_call.1} parent=1 // pred_check_branch
      %101 = sbr.rel (0) target = $region53
    $region52: #{tpu_custom_call.1} parent=1 // pred_region
      %102 = dma.done [#allocation9], 512
    $region53: #{tpu_custom_call.1} parent=1 // pred_fallthru
      _
    // Predicated region
    $region54: #{tpu_custom_call.1} parent=1 // pred_check
      _
    $region55: #{tpu_custom_call.1} parent=1 // pred_check_branch
      %104 = sbr.rel (0) target = $region57
    $region56: #{tpu_custom_call.1} parent=1 // pred_region
      %105 = dma.done [#allocation12], 512
    $region57: #{tpu_custom_call.1} parent=1 // pred_fallthru
      _
    %v106 = vld [vmem:[#allocation2] sm:$0xff]
    %v107 = vld [vmem:[#allocation2 + $0x8] sm:$0xff]
    %v108 = vld [vmem:[#allocation8] sm:$0xff]
    %v109 = vld [vmem:[#allocation8 + $0x8] sm:$0xff]
    %v110 = vld [vmem:[#allocation8 + $0x10] sm:$0xff]
    %v111 = vld [vmem:[#allocation8 + $0x18] sm:$0xff]
    %v112 = vld [vmem:[#allocation8 + $0x20] sm:$0xff]
    %v113 = vld [vmem:[#allocation8 + $0x28] sm:$0xff]
    %v114 = vld [vmem:[#allocation8 + $0x30] sm:$0xff]
    %v115 = vld [vmem:[#allocation8 + $0x38] sm:$0xff]
    %v116 = vld [vmem:[#allocation8 + $0x40] sm:$0xff]
    %v117 = vld [vmem:[#allocation8 + $0x48] sm:$0xff]
    %v118 = vld [vmem:[#allocation8 + $0x50] sm:$0xff]
    %v119 = vld [vmem:[#allocation8 + $0x58] sm:$0xff]
    %v120 = vld [vmem:[#allocation8 + $0x60] sm:$0xff]
    %v121 = vld [vmem:[#allocation8 + $0x68] sm:$0xff]
    %v122 = vld [vmem:[#allocation8 + $0x70] sm:$0xff]
    %v123 = vld [vmem:[#allocation8 + $0x78] sm:$0xff]
    %v124 = vld [vmem:[#allocation8 + $0x80] sm:$0xff]
    %v125 = vld [vmem:[#allocation8 + $0x88] sm:$0xff]
    %v126 = vld [vmem:[#allocation8 + $0x90] sm:$0xff]
    %v127 = vld [vmem:[#allocation8 + $0x98] sm:$0xff]
    %v128 = vld [vmem:[#allocation8 + $0xa0] sm:$0xff]
    %v129 = vld [vmem:[#allocation8 + $0xa8] sm:$0xff]
    %v130 = vld [vmem:[#allocation8 + $0xb0] sm:$0xff]
    %v131 = vld [vmem:[#allocation8 + $0xb8] sm:$0xff]
    %v132 = vld [vmem:[#allocation8 + $0xc0] sm:$0xff]
    %v133 = vld [vmem:[#allocation8 + $0xc8] sm:$0xff]
    %v134 = vld [vmem:[#allocation8 + $0xd0] sm:$0xff]
    %v135 = vld [vmem:[#allocation8 + $0xd8] sm:$0xff]
    %v136 = vld [vmem:[#allocation8 + $0xe0] sm:$0xff]
    %v137 = vld [vmem:[#allocation8 + $0xe8] sm:$0xff]
    %v138 = vld [vmem:[#allocation8 + $0xf0] sm:$0xff]
    %v139 = vld [vmem:[#allocation8 + $0xf8] sm:$0xff]
    %v140 = vld [vmem:[#allocation8 + $0x100] sm:$0xff]
    %v141 = vld [vmem:[#allocation8 + $0x108] sm:$0xff]
    %v142 = vld [vmem:[#allocation8 + $0x110] sm:$0xff]
    %v143 = vld [vmem:[#allocation8 + $0x118] sm:$0xff]
    %v144 = vld [vmem:[#allocation8 + $0x120] sm:$0xff]
    %v145 = vld [vmem:[#allocation8 + $0x128] sm:$0xff]
    %v146 = vld [vmem:[#allocation8 + $0x130] sm:$0xff]
    %v147 = vld [vmem:[#allocation8 + $0x138] sm:$0xff]
    %v148 = vld [vmem:[#allocation8 + $0x140] sm:$0xff]
    %v149 = vld [vmem:[#allocation8 + $0x148] sm:$0xff]
    %v150 = vld [vmem:[#allocation8 + $0x150] sm:$0xff]
    %v151 = vld [vmem:[#allocation8 + $0x158] sm:$0xff]
    %v152 = vld [vmem:[#allocation8 + $0x160] sm:$0xff]
    %v153 = vld [vmem:[#allocation8 + $0x168] sm:$0xff]
    %v154 = vld [vmem:[#allocation8 + $0x170] sm:$0xff]
    %v155 = vld [vmem:[#allocation8 + $0x178] sm:$0xff]
    %v156 = vld [vmem:[#allocation8 + $0x180] sm:$0xff]
    %v157 = vld [vmem:[#allocation8 + $0x188] sm:$0xff]
    %v158 = vld [vmem:[#allocation8 + $0x190] sm:$0xff]
    %v159 = vld [vmem:[#allocation8 + $0x198] sm:$0xff]
    %v160 = vld [vmem:[#allocation8 + $0x1a0] sm:$0xff]
    %v161 = vld [vmem:[#allocation8 + $0x1a8] sm:$0xff]
    %v162 = vld [vmem:[#allocation8 + $0x1b0] sm:$0xff]
    %v163 = vld [vmem:[#allocation8 + $0x1b8] sm:$0xff]
    %v164 = vld [vmem:[#allocation8 + $0x1c0] sm:$0xff]
    %v165 = vld [vmem:[#allocation8 + $0x1c8] sm:$0xff]
    %v166 = vld [vmem:[#allocation8 + $0x1d0] sm:$0xff]
    %v167 = vld [vmem:[#allocation8 + $0x1d8] sm:$0xff]
    %v168 = vld [vmem:[#allocation8 + $0x1e0] sm:$0xff]
    %v169 = vld [vmem:[#allocation8 + $0x1e8] sm:$0xff]
    %v170 = vld [vmem:[#allocation8 + $0x1f0] sm:$0xff]
    %v171 = vld [vmem:[#allocation8 + $0x1f8] sm:$0xff]
    %v172 = vld [vmem:[#allocation8 + $0x200] sm:$0xff]
    %v173 = vld [vmem:[#allocation8 + $0x208] sm:$0xff]
    %v174 = vld [vmem:[#allocation8 + $0x210] sm:$0xff]
    %v175 = vld [vmem:[#allocation8 + $0x218] sm:$0xff]
    %v176 = vld [vmem:[#allocation8 + $0x220] sm:$0xff]
    %v177 = vld [vmem:[#allocation8 + $0x228] sm:$0xff]
    %v178 = vld [vmem:[#allocation8 + $0x230] sm:$0xff]
    %v179 = vld [vmem:[#allocation8 + $0x238] sm:$0xff]
    %v180 = vld [vmem:[#allocation8 + $0x240] sm:$0xff]
    %v181 = vld [vmem:[#allocation8 + $0x248] sm:$0xff]
    %v182 = vld [vmem:[#allocation8 + $0x250] sm:$0xff]
    %v183 = vld [vmem:[#allocation8 + $0x258] sm:$0xff]
    %v184 = vld [vmem:[#allocation8 + $0x260] sm:$0xff]
    %v185 = vld [vmem:[#allocation8 + $0x268] sm:$0xff]
    %v186 = vld [vmem:[#allocation8 + $0x270] sm:$0xff]
    %v187 = vld [vmem:[#allocation8 + $0x278] sm:$0xff]
    %v188 = vld [vmem:[#allocation8 + $0x280] sm:$0xff]
    %v189 = vld [vmem:[#allocation8 + $0x288] sm:$0xff]
    %v190 = vld [vmem:[#allocation8 + $0x290] sm:$0xff]
    %v191 = vld [vmem:[#allocation8 + $0x298] sm:$0xff]
    %v192 = vld [vmem:[#allocation8 + $0x2a0] sm:$0xff]
    %v193 = vld [vmem:[#allocation8 + $0x2a8] sm:$0xff]
    %v194 = vld [vmem:[#allocation8 + $0x2b0] sm:$0xff]
    %v195 = vld [vmem:[#allocation8 + $0x2b8] sm:$0xff]
    %v196 = vld [vmem:[#allocation8 + $0x2c0] sm:$0xff]
    %v197 = vld [vmem:[#allocation8 + $0x2c8] sm:$0xff]
    %v198 = vld [vmem:[#allocation8 + $0x2d0] sm:$0xff]
    %v199 = vld [vmem:[#allocation8 + $0x2d8] sm:$0xff]
    %v200 = vld [vmem:[#allocation8 + $0x2e0] sm:$0xff]
    %v201 = vld [vmem:[#allocation8 + $0x2e8] sm:$0xff]
    %v202 = vld [vmem:[#allocation8 + $0x2f0] sm:$0xff]
    %v203 = vld [vmem:[#allocation8 + $0x2f8] sm:$0xff]
    %v204 = vld [vmem:[#allocation8 + $0x300] sm:$0xff]
    %v205 = vld [vmem:[#allocation8 + $0x308] sm:$0xff]
    %v206 = vld [vmem:[#allocation8 + $0x310] sm:$0xff]
    %v207 = vld [vmem:[#allocation8 + $0x318] sm:$0xff]
    %v208 = vld [vmem:[#allocation8 + $0x320] sm:$0xff]
    %v209 = vld [vmem:[#allocation8 + $0x328] sm:$0xff]
    %v210 = vld [vmem:[#allocation8 + $0x330] sm:$0xff]
    %v211 = vld [vmem:[#allocation8 + $0x338] sm:$0xff]
    %v212 = vld [vmem:[#allocation8 + $0x340] sm:$0xff]
    %v213 = vld [vmem:[#allocation8 + $0x348] sm:$0xff]
    %v214 = vld [vmem:[#allocation8 + $0x350] sm:$0xff]
    %v215 = vld [vmem:[#allocation8 + $0x358] sm:$0xff]
    %v216 = vld [vmem:[#allocation8 + $0x360] sm:$0xff]
    %v217 = vld [vmem:[#allocation8 + $0x368] sm:$0xff]
    %v218 = vld [vmem:[#allocation8 + $0x370] sm:$0xff]
    %v219 = vld [vmem:[#allocation8 + $0x378] sm:$0xff]
    %v220 = vld [vmem:[#allocation8 + $0x380] sm:$0xff]
    %v221 = vld [vmem:[#allocation8 + $0x388] sm:$0xff]
    %v222 = vld [vmem:[#allocation8 + $0x390] sm:$0xff]
    %v223 = vld [vmem:[#allocation8 + $0x398] sm:$0xff]
    %v224 = vld [vmem:[#allocation8 + $0x3a0] sm:$0xff]
    %v225 = vld [vmem:[#allocation8 + $0x3a8] sm:$0xff]
    %v226 = vld [vmem:[#allocation8 + $0x3b0] sm:$0xff]
    %v227 = vld [vmem:[#allocation8 + $0x3b8] sm:$0xff]
    %v228 = vld [vmem:[#allocation8 + $0x3c0] sm:$0xff]
    %v229 = vld [vmem:[#allocation8 + $0x3c8] sm:$0xff]
    %v230 = vld [vmem:[#allocation8 + $0x3d0] sm:$0xff]
    %v231 = vld [vmem:[#allocation8 + $0x3d8] sm:$0xff]
    %v232 = vld [vmem:[#allocation8 + $0x3e0] sm:$0xff]
    %v233 = vld [vmem:[#allocation8 + $0x3e8] sm:$0xff]
    %v234 = vld [vmem:[#allocation8 + $0x3f0] sm:$0xff]
    %v235 = vld [vmem:[#allocation8 + $0x3f8] sm:$0xff]
    %v236 = vld [vmem:[#allocation8 + $0x400] sm:$0xff]
    %v237 = vld [vmem:[#allocation8 + $0x408] sm:$0xff]
    %v238 = vld [vmem:[#allocation8 + $0x410] sm:$0xff]
    %v239 = vld [vmem:[#allocation8 + $0x418] sm:$0xff]
    %v240 = vld [vmem:[#allocation8 + $0x420] sm:$0xff]
    %v241 = vld [vmem:[#allocation8 + $0x428] sm:$0xff]
    %v242 = vld [vmem:[#allocation8 + $0x430] sm:$0xff]
    %v243 = vld [vmem:[#allocation8 + $0x438] sm:$0xff]
    %v244 = vld [vmem:[#allocation8 + $0x440] sm:$0xff]
    %v245 = vld [vmem:[#allocation8 + $0x448] sm:$0xff]
    %v246 = vld [vmem:[#allocation8 + $0x450] sm:$0xff]
    %v247 = vld [vmem:[#allocation8 + $0x458] sm:$0xff]
    %v248 = vld [vmem:[#allocation8 + $0x460] sm:$0xff]
    %v249 = vld [vmem:[#allocation8 + $0x468] sm:$0xff]
    %v250 = vld [vmem:[#allocation8 + $0x470] sm:$0xff]
    %v251 = vld [vmem:[#allocation8 + $0x478] sm:$0xff]
    %v252 = vld [vmem:[#allocation8 + $0x480] sm:$0xff]
    %v253 = vld [vmem:[#allocation8 + $0x488] sm:$0xff]
    %v254 = vld [vmem:[#allocation8 + $0x490] sm:$0xff]
    %v255 = vld [vmem:[#allocation8 + $0x498] sm:$0xff]
    %v256 = vld [vmem:[#allocation8 + $0x4a0] sm:$0xff]
    %v257 = vld [vmem:[#allocation8 + $0x4a8] sm:$0xff]
    %v258 = vld [vmem:[#allocation8 + $0x4b0] sm:$0xff]
    %v259 = vld [vmem:[#allocation8 + $0x4b8] sm:$0xff]
    %v260 = vld [vmem:[#allocation8 + $0x4c0] sm:$0xff]
    %v261 = vld [vmem:[#allocation8 + $0x4c8] sm:$0xff]
    %v262 = vld [vmem:[#allocation8 + $0x4d0] sm:$0xff]
    %v263 = vld [vmem:[#allocation8 + $0x4d8] sm:$0xff]
    %v264 = vld [vmem:[#allocation8 + $0x4e0] sm:$0xff]
    %v265 = vld [vmem:[#allocation8 + $0x4e8] sm:$0xff]
    %v266 = vld [vmem:[#allocation8 + $0x4f0] sm:$0xff]
    %v267 = vld [vmem:[#allocation8 + $0x4f8] sm:$0xff]
    %v268 = vld [vmem:[#allocation8 + $0x500] sm:$0xff]
    %v269 = vld [vmem:[#allocation8 + $0x508] sm:$0xff]
    %v270 = vld [vmem:[#allocation8 + $0x510] sm:$0xff]
    %v271 = vld [vmem:[#allocation8 + $0x518] sm:$0xff]
    %v272 = vld [vmem:[#allocation8 + $0x520] sm:$0xff]
    %v273 = vld [vmem:[#allocation8 + $0x528] sm:$0xff]
    %v274 = vld [vmem:[#allocation8 + $0x530] sm:$0xff]
    %v275 = vld [vmem:[#allocation8 + $0x538] sm:$0xff]
    %v276 = vld [vmem:[#allocation8 + $0x540] sm:$0xff]
    %v277 = vld [vmem:[#allocation8 + $0x548] sm:$0xff]
    %v278 = vld [vmem:[#allocation8 + $0x550] sm:$0xff]
    %v279 = vld [vmem:[#allocation8 + $0x558] sm:$0xff]
    %v280 = vld [vmem:[#allocation8 + $0x560] sm:$0xff]
    %v281 = vld [vmem:[#allocation8 + $0x568] sm:$0xff]
    %v282 = vld [vmem:[#allocation8 + $0x570] sm:$0xff]
    %v283 = vld [vmem:[#allocation8 + $0x578] sm:$0xff]
    %v284 = vld [vmem:[#allocation8 + $0x580] sm:$0xff]
    %v285 = vld [vmem:[#allocation8 + $0x588] sm:$0xff]
    %v286 = vld [vmem:[#allocation8 + $0x590] sm:$0xff]
    %v287 = vld [vmem:[#allocation8 + $0x598] sm:$0xff]
    %v288 = vld [vmem:[#allocation8 + $0x5a0] sm:$0xff]
    %v289 = vld [vmem:[#allocation8 + $0x5a8] sm:$0xff]
    %v290 = vld [vmem:[#allocation8 + $0x5b0] sm:$0xff]
    %v291 = vld [vmem:[#allocation8 + $0x5b8] sm:$0xff]
    %v292 = vld [vmem:[#allocation8 + $0x5c0] sm:$0xff]
    %v293 = vld [vmem:[#allocation8 + $0x5c8] sm:$0xff]
    %v294 = vld [vmem:[#allocation8 + $0x5d0] sm:$0xff]
    %v295 = vld [vmem:[#allocation8 + $0x5d8] sm:$0xff]
    %v296 = vld [vmem:[#allocation8 + $0x5e0] sm:$0xff]
    %v297 = vld [vmem:[#allocation8 + $0x5e8] sm:$0xff]
    %v298 = vld [vmem:[#allocation8 + $0x5f0] sm:$0xff]
    %v299 = vld [vmem:[#allocation8 + $0x5f8] sm:$0xff]
    %v300 = vld [vmem:[#allocation8 + $0x600] sm:$0xff]
    %v301 = vld [vmem:[#allocation8 + $0x608] sm:$0xff]
    %v302 = vld [vmem:[#allocation8 + $0x610] sm:$0xff]
    %v303 = vld [vmem:[#allocation8 + $0x618] sm:$0xff]
    %v304 = vld [vmem:[#allocation8 + $0x620] sm:$0xff]
    %v305 = vld [vmem:[#allocation8 + $0x628] sm:$0xff]
    %v306 = vld [vmem:[#allocation8 + $0x630] sm:$0xff]
    %v307 = vld [vmem:[#allocation8 + $0x638] sm:$0xff]
    %v308 = vld [vmem:[#allocation8 + $0x640] sm:$0xff]
    %v309 = vld [vmem:[#allocation8 + $0x648] sm:$0xff]
    %v310 = vld [vmem:[#allocation8 + $0x650] sm:$0xff]
    %v311 = vld [vmem:[#allocation8 + $0x658] sm:$0xff]
    %v312 = vld [vmem:[#allocation8 + $0x660] sm:$0xff]
    %v313 = vld [vmem:[#allocation8 + $0x668] sm:$0xff]
    %v314 = vld [vmem:[#allocation8 + $0x670] sm:$0xff]
    %v315 = vld [vmem:[#allocation8 + $0x678] sm:$0xff]
    %v316 = vld [vmem:[#allocation8 + $0x680] sm:$0xff]
    %v317 = vld [vmem:[#allocation8 + $0x688] sm:$0xff]
    %v318 = vld [vmem:[#allocation8 + $0x690] sm:$0xff]
    %v319 = vld [vmem:[#allocation8 + $0x698] sm:$0xff]
    %v320 = vld [vmem:[#allocation8 + $0x6a0] sm:$0xff]
    %v321 = vld [vmem:[#allocation8 + $0x6a8] sm:$0xff]
    %v322 = vld [vmem:[#allocation8 + $0x6b0] sm:$0xff]
    %v323 = vld [vmem:[#allocation8 + $0x6b8] sm:$0xff]
    %v324 = vld [vmem:[#allocation8 + $0x6c0] sm:$0xff]
    %v325 = vld [vmem:[#allocation8 + $0x6c8] sm:$0xff]
    %v326 = vld [vmem:[#allocation8 + $0x6d0] sm:$0xff]
    %v327 = vld [vmem:[#allocation8 + $0x6d8] sm:$0xff]
    %v328 = vld [vmem:[#allocation8 + $0x6e0] sm:$0xff]
    %v329 = vld [vmem:[#allocation8 + $0x6e8] sm:$0xff]
    %v330 = vld [vmem:[#allocation8 + $0x6f0] sm:$0xff]
    %v331 = vld [vmem:[#allocation8 + $0x6f8] sm:$0xff]
    %v332 = vld [vmem:[#allocation8 + $0x700] sm:$0xff]
    %v333 = vld [vmem:[#allocation8 + $0x708] sm:$0xff]
    %v334 = vld [vmem:[#allocation8 + $0x710] sm:$0xff]
    %v335 = vld [vmem:[#allocation8 + $0x718] sm:$0xff]
    %v336 = vld [vmem:[#allocation8 + $0x720] sm:$0xff]
    %v337 = vld [vmem:[#allocation8 + $0x728] sm:$0xff]
    %v338 = vld [vmem:[#allocation8 + $0x730] sm:$0xff]
    %v339 = vld [vmem:[#allocation8 + $0x738] sm:$0xff]
    %v340 = vld [vmem:[#allocation8 + $0x740] sm:$0xff]
    %v341 = vld [vmem:[#allocation8 + $0x748] sm:$0xff]
    %v342 = vld [vmem:[#allocation8 + $0x750] sm:$0xff]
    %v343 = vld [vmem:[#allocation8 + $0x758] sm:$0xff]
    %v344 = vld [vmem:[#allocation8 + $0x760] sm:$0xff]
    %v345 = vld [vmem:[#allocation8 + $0x768] sm:$0xff]
    %v346 = vld [vmem:[#allocation8 + $0x770] sm:$0xff]
    %v347 = vld [vmem:[#allocation8 + $0x778] sm:$0xff]
    %v348 = vld [vmem:[#allocation8 + $0x780] sm:$0xff]
    %v349 = vld [vmem:[#allocation8 + $0x788] sm:$0xff]
    %v350 = vld [vmem:[#allocation8 + $0x790] sm:$0xff]
    %v351 = vld [vmem:[#allocation8 + $0x798] sm:$0xff]
    %v352 = vld [vmem:[#allocation8 + $0x7a0] sm:$0xff]
    %v353 = vld [vmem:[#allocation8 + $0x7a8] sm:$0xff]
    %v354 = vld [vmem:[#allocation8 + $0x7b0] sm:$0xff]
    %v355 = vld [vmem:[#allocation8 + $0x7b8] sm:$0xff]
    %v356 = vld [vmem:[#allocation8 + $0x7c0] sm:$0xff]
    %v357 = vld [vmem:[#allocation8 + $0x7c8] sm:$0xff]
    %v358 = vld [vmem:[#allocation8 + $0x7d0] sm:$0xff]
    %v359 = vld [vmem:[#allocation8 + $0x7d8] sm:$0xff]
    %v360 = vld [vmem:[#allocation8 + $0x7e0] sm:$0xff]
    %v361 = vld [vmem:[#allocation8 + $0x7e8] sm:$0xff]
    %v362 = vld [vmem:[#allocation8 + $0x7f0] sm:$0xff]
    %v363 = vld [vmem:[#allocation8 + $0x7f8] sm:$0xff]
    %364 = vmatprep.subr.mxu0 %v109
    %365 = vmatpush1.msra.mxu0 %v108
    %366 = vmatprep.subr.mxu0 %v117
    %367 = vmatpush1.msra.mxu0 %v116
    %368 = vmatprep.subr.mxu0 %v125
    %369 = vmatpush1.msra.mxu0 %v124
    %370 = vmatprep.subr.mxu0 %v133
    %371 = vmatpush1.msra.mxu0 %v132
    %372 = vmatprep.subr.mxu0 %v141
    %373 = vmatpush1.msra.mxu0 %v140
    %374 = vmatprep.subr.mxu0 %v149
    %375 = vmatpush1.msra.mxu0 %v148
    %376 = vmatprep.subr.mxu0 %v157
    %377 = vmatpush1.msra.mxu0 %v156
    %378 = vmatprep.subr.mxu0 %v165
    %379 = vmatpush1.msra.mxu0 %v164
    %380 = vmatprep.subr.mxu0 %v173
    %381 = vmatpush1.msra.mxu0 %v172
    %382 = vmatprep.subr.mxu0 %v181
    %383 = vmatpush1.msra.mxu0 %v180
    %384 = vmatprep.subr.mxu0 %v189
    %385 = vmatpush1.msra.mxu0 %v188
    %386 = vmatprep.subr.mxu0 %v197
    %387 = vmatpush1.msra.mxu0 %v196
    %388 = vmatprep.subr.mxu0 %v205
    %389 = vmatpush1.msra.mxu0 %v204
    %390 = vmatprep.subr.mxu0 %v213
    %391 = vmatpush1.msra.mxu0 %v212
    %392 = vmatprep.subr.mxu0 %v221
    %393 = vmatpush1.msra.mxu0 %v220
    %394 = vmatprep.subr.mxu0 %v229
    %395 = vmatpush1.msra.mxu0 %v228
    %396 = vmatprep.subr.mxu0 %v237
    %397 = vmatpush1.msra.mxu0 %v236
    %398 = vmatprep.subr.mxu0 %v245
    %399 = vmatpush1.msra.mxu0 %v244
    %400 = vmatprep.subr.mxu0 %v253
    %401 = vmatpush1.msra.mxu0 %v252
    %402 = vmatprep.subr.mxu0 %v261
    %403 = vmatpush1.msra.mxu0 %v260
    %404 = vmatprep.subr.mxu0 %v269
    %405 = vmatpush1.msra.mxu0 %v268
    %406 = vmatprep.subr.mxu0 %v277
    %407 = vmatpush1.msra.mxu0 %v276
    %408 = vmatprep.subr.mxu0 %v285
    %409 = vmatpush1.msra.mxu0 %v284
    %410 = vmatprep.subr.mxu0 %v293
    %411 = vmatpush1.msra.mxu0 %v292
    %412 = vmatprep.subr.mxu0 %v301
    %413 = vmatpush1.msra.mxu0 %v300
    %414 = vmatprep.subr.mxu0 %v309
    %415 = vmatpush1.msra.mxu0 %v308
    %416 = vmatprep.subr.mxu0 %v317
    %417 = vmatpush1.msra.mxu0 %v316
    %418 = vmatprep.subr.mxu0 %v325
    %419 = vmatpush1.msra.mxu0 %v324
    %420 = vmatprep.subr.mxu0 %v333
    %421 = vmatpush1.msra.mxu0 %v332
    %422 = vmatprep.subr.mxu0 %v341
    %423 = vmatpush1.msra.mxu0 %v340
    %424 = vmatprep.subr.mxu0 %v349
    %425 = vmatpush1.msra.mxu0 %v348
    %426 = vmatprep.subr.mxu0 %v357
    %427 = vmatpush1.msra.mxu0 %v356
    %428 = vmatprep.mubr.f32.mxu0 %v107
    %429 = vmatmul.mubr.f32.gmra.mrb[0].mxu0 %v106
    %v430 = vpop.f32.mrb[0].mxu0
    %v431 = vadd.f32 0.0, %v430
    %v432 = vpop.f32.mrb[0].mxu0
    %v433 = vadd.f32 0.0, %v432
    %434 = vdwg.mxu0
    %435 = vmatprep.subr.mxu0 %v111
    %436 = vmatpush1.msra.mxu0 %v110
    %437 = vmatprep.subr.mxu0 %v119
    %438 = vmatpush1.msra.mxu0 %v118
    %439 = vmatprep.subr.mxu0 %v127
    %440 = vmatpush1.msra.mxu0 %v126
    %441 = vmatprep.subr.mxu0 %v135
    %442 = vmatpush1.msra.mxu0 %v134
    %443 = vmatprep.subr.mxu0 %v143
    %444 = vmatpush1.msra.mxu0 %v142
    %445 = vmatprep.subr.mxu0 %v151
    %446 = vmatpush1.msra.mxu0 %v150
    %447 = vmatprep.subr.mxu0 %v159
    %448 = vmatpush1.msra.mxu0 %v158
    %449 = vmatprep.subr.mxu0 %v167
    %450 = vmatpush1.msra.mxu0 %v166
    %451 = vmatprep.subr.mxu0 %v175
    %452 = vmatpush1.msra.mxu0 %v174
    %453 = vmatprep.subr.mxu0 %v183
    %454 = vmatpush1.msra.mxu0 %v182
    %455 = vmatprep.subr.mxu0 %v191
    %456 = vmatpush1.msra.mxu0 %v190
    %457 = vmatprep.subr.mxu0 %v199
    %458 = vmatpush1.msra.mxu0 %v198
    %459 = vmatprep.subr.mxu0 %v207
    %460 = vmatpush1.msra.mxu0 %v206
    %461 = vmatprep.subr.mxu0 %v215
    %462 = vmatpush1.msra.mxu0 %v214
    %463 = vmatprep.subr.mxu0 %v223
    %464 = vmatpush1.msra.mxu0 %v222
    %465 = vmatprep.subr.mxu0 %v231
    %466 = vmatpush1.msra.mxu0 %v230
    %467 = vmatprep.subr.mxu0 %v239
    %468 = vmatpush1.msra.mxu0 %v238
    %469 = vmatprep.subr.mxu0 %v247
    %470 = vmatpush1.msra.mxu0 %v246
    %471 = vmatprep.subr.mxu0 %v255
    %472 = vmatpush1.msra.mxu0 %v254
    %473 = vmatprep.subr.mxu0 %v263
    %474 = vmatpush1.msra.mxu0 %v262
    %475 = vmatprep.subr.mxu0 %v271
    %476 = vmatpush1.msra.mxu0 %v270
    %477 = vmatprep.subr.mxu0 %v279
    %478 = vmatpush1.msra.mxu0 %v278
    %479 = vmatprep.subr.mxu0 %v287
    %480 = vmatpush1.msra.mxu0 %v286
    %481 = vmatprep.subr.mxu0 %v295
    %482 = vmatpush1.msra.mxu0 %v294
    %483 = vmatprep.subr.mxu0 %v303
    %484 = vmatpush1.msra.mxu0 %v302
    %485 = vmatprep.subr.mxu0 %v311
    %486 = vmatpush1.msra.mxu0 %v310
    %487 = vmatprep.subr.mxu0 %v319
    %488 = vmatpush1.msra.mxu0 %v318
    %489 = vmatprep.subr.mxu0 %v327
    %490 = vmatpush1.msra.mxu0 %v326
    %491 = vmatprep.subr.mxu0 %v335
    %492 = vmatpush1.msra.mxu0 %v334
    %493 = vmatprep.subr.mxu0 %v343
    %494 = vmatpush1.msra.mxu0 %v342
    %495 = vmatprep.subr.mxu0 %v351
    %496 = vmatpush1.msra.mxu0 %v350
    %497 = vmatprep.subr.mxu0 %v359
    %498 = vmatpush1.msra.mxu0 %v358
    %499 = vmatprep.mubr.f32.mxu0 %v107
    %500 = vmatmul.mubr.f32.gmra.mrb[0].mxu0 %v106
    %v501 = vpop.f32.mrb[0].mxu0
    %v502 = vadd.f32 0.0, %v501
    %v503 = vpop.f32.mrb[0].mxu0
    %v504 = vadd.f32 0.0, %v503
    %505 = vdwg.mxu0
    %506 = vmatprep.subr.mxu0 %v113
    %507 = vmatpush1.msra.mxu0 %v112
    %508 = vmatprep.subr.mxu0 %v121
    %509 = vmatpush1.msra.mxu0 %v120
    %510 = vmatprep.subr.mxu0 %v129
    %511 = vmatpush1.msra.mxu0 %v128
    %512 = vmatprep.subr.mxu0 %v137
    %513 = vmatpush1.msra.mxu0 %v136
    %514 = vmatprep.subr.mxu0 %v145
    %515 = vmatpush1.msra.mxu0 %v144
    %516 = vmatprep.subr.mxu0 %v153
    %517 = vmatpush1.msra.mxu0 %v152
    %518 = vmatprep.subr.mxu0 %v161
    %519 = vmatpush1.msra.mxu0 %v160
    %520 = vmatprep.subr.mxu0 %v169
    %521 = vmatpush1.msra.mxu0 %v168
    %522 = vmatprep.subr.mxu0 %v177
    %523 = vmatpush1.msra.mxu0 %v176
    %524 = vmatprep.subr.mxu0 %v185
    %525 = vmatpush1.msra.mxu0 %v184
    %526 = vmatprep.subr.mxu0 %v193
    %527 = vmatpush1.msra.mxu0 %v192
    %528 = vmatprep.subr.mxu0 %v201
    %529 = vmatpush1.msra.mxu0 %v200
    %530 = vmatprep.subr.mxu0 %v209
    %531 = vmatpush1.msra.mxu0 %v208
    %532 = vmatprep.subr.mxu0 %v217
    %533 = vmatpush1.msra.mxu0 %v216
    %534 = vmatprep.subr.mxu0 %v225
    %535 = vmatpush1.msra.mxu0 %v224
    %536 = vmatprep.subr.mxu0 %v233
    %537 = vmatpush1.msra.mxu0 %v232
    %538 = vmatprep.subr.mxu0 %v241
    %539 = vmatpush1.msra.mxu0 %v240
    %540 = vmatprep.subr.mxu0 %v249
    %541 = vmatpush1.msra.mxu0 %v248
    %542 = vmatprep.subr.mxu0 %v257
    %543 = vmatpush1.msra.mxu0 %v256
    %544 = vmatprep.subr.mxu0 %v265
    %545 = vmatpush1.msra.mxu0 %v264
    %546 = vmatprep.subr.mxu0 %v273
    %547 = vmatpush1.msra.mxu0 %v272
    %548 = vmatprep.subr.mxu0 %v281
    %549 = vmatpush1.msra.mxu0 %v280
    %550 = vmatprep.subr.mxu0 %v289
    %551 = vmatpush1.msra.mxu0 %v288
    %552 = vmatprep.subr.mxu0 %v297
    %553 = vmatpush1.msra.mxu0 %v296
    %554 = vmatprep.subr.mxu0 %v305
    %555 = vmatpush1.msra.mxu0 %v304
    %556 = vmatprep.subr.mxu0 %v313
    %557 = vmatpush1.msra.mxu0 %v312
    %558 = vmatprep.subr.mxu0 %v321
    %559 = vmatpush1.msra.mxu0 %v320
    %560 = vmatprep.subr.mxu0 %v329
    %561 = vmatpush1.msra.mxu0 %v328
    %562 = vmatprep.subr.mxu0 %v337
    %563 = vmatpush1.msra.mxu0 %v336
    %564 = vmatprep.subr.mxu0 %v345
    %565 = vmatpush1.msra.mxu0 %v344
    %566 = vmatprep.subr.mxu0 %v353
    %567 = vmatpush1.msra.mxu0 %v352
    %568 = vmatprep.subr.mxu0 %v361
    %569 = vmatpush1.msra.mxu0 %v360
    %570 = vmatprep.mubr.f32.mxu0 %v107
    %571 = vmatmul.mubr.f32.gmra.mrb[0].mxu0 %v106
    %v572 = vpop.f32.mrb[0].mxu0
    %v573 = vadd.f32 0.0, %v572
    %v574 = vpop.f32.mrb[0].mxu0
    %v575 = vadd.f32 0.0, %v574
    %576 = vdwg.mxu0
    %577 = vmatprep.subr.mxu0 %v115
    %578 = vmatpush1.msra.mxu0 %v114
    %579 = vmatprep.subr.mxu0 %v123
    %580 = vmatpush1.msra.mxu0 %v122
    %581 = vmatprep.subr.mxu0 %v131
    %582 = vmatpush1.msra.mxu0 %v130
    %583 = vmatprep.subr.mxu0 %v139
    %584 = vmatpush1.msra.mxu0 %v138
    %585 = vmatprep.subr.mxu0 %v147
    %586 = vmatpush1.msra.mxu0 %v146
    %587 = vmatprep.subr.mxu0 %v155
    %588 = vmatpush1.msra.mxu0 %v154
    %589 = vmatprep.subr.mxu0 %v163
    %590 = vmatpush1.msra.mxu0 %v162
    %591 = vmatprep.subr.mxu0 %v171
    %592 = vmatpush1.msra.mxu0 %v170
    %593 = vmatprep.subr.mxu0 %v179
    %594 = vmatpush1.msra.mxu0 %v178
    %595 = vmatprep.subr.mxu0 %v187
    %596 = vmatpush1.msra.mxu0 %v186
    %597 = vmatprep.subr.mxu0 %v195
    %598 = vmatpush1.msra.mxu0 %v194
    %599 = vmatprep.subr.mxu0 %v203
    %600 = vmatpush1.msra.mxu0 %v202
    %601 = vmatprep.subr.mxu0 %v211
    %602 = vmatpush1.msra.mxu0 %v210
    %603 = vmatprep.subr.mxu0 %v219
    %604 = vmatpush1.msra.mxu0 %v218
    %605 = vmatprep.subr.mxu0 %v227
    %606 = vmatpush1.msra.mxu0 %v226
    %607 = vmatprep.subr.mxu0 %v235
    %608 = vmatpush1.msra.mxu0 %v234
    %609 = vmatprep.subr.mxu0 %v243
    %610 = vmatpush1.msra.mxu0 %v242
    %611 = vmatprep.subr.mxu0 %v251
    %612 = vmatpush1.msra.mxu0 %v250
    %613 = vmatprep.subr.mxu0 %v259
    %614 = vmatpush1.msra.mxu0 %v258
    %615 = vmatprep.subr.mxu0 %v267
    %616 = vmatpush1.msra.mxu0 %v266
    %617 = vmatprep.subr.mxu0 %v275
    %618 = vmatpush1.msra.mxu0 %v274
    %619 = vmatprep.subr.mxu0 %v283
    %620 = vmatpush1.msra.mxu0 %v282
    %621 = vmatprep.subr.mxu0 %v291
    %622 = vmatpush1.msra.mxu0 %v290
    %623 = vmatprep.subr.mxu0 %v299
    %624 = vmatpush1.msra.mxu0 %v298
    %625 = vmatprep.subr.mxu0 %v307
    %626 = vmatpush1.msra.mxu0 %v306
    %627 = vmatprep.subr.mxu0 %v315
    %628 = vmatpush1.msra.mxu0 %v314
    %629 = vmatprep.subr.mxu0 %v323
    %630 = vmatpush1.msra.mxu0 %v322
    %631 = vmatprep.subr.mxu0 %v331
    %632 = vmatpush1.msra.mxu0 %v330
    %633 = vmatprep.subr.mxu0 %v339
    %634 = vmatpush1.msra.mxu0 %v338
    %635 = vmatprep.subr.mxu0 %v347
    %636 = vmatpush1.msra.mxu0 %v346
    %637 = vmatprep.subr.mxu0 %v355
    %638 = vmatpush1.msra.mxu0 %v354
    %639 = vmatprep.subr.mxu0 %v363
    %640 = vmatpush1.msra.mxu0 %v362
    %641 = vmatprep.mubr.f32.mxu0 %v107
    %642 = vmatmul.mubr.f32.gmra.mrb[0].mxu0 %v106
    %v643 = vpop.f32.mrb[0].mxu0
    %v644 = vadd.f32 0.0, %v643
    %v645 = vpop.f32.mrb[0].mxu0
    %v646 = vadd.f32 0.0, %v645
    %647 = vdwg.mxu0
    %v648 = vld [vmem:[#allocation5] sm:$0xff]
    %v649 = vld [vmem:[#allocation7] sm:$0xff]
    %v650 = vld [vmem:[#allocation10] sm:$0xff]
    %v651 = vld [vmem:[#allocation10 + $0x8] sm:$0xff]
    %v652 = vld [vmem:[#allocation10 + $0x10] sm:$0xff]
    %v653 = vld [vmem:[#allocation10 + $0x18] sm:$0xff]
    %v654 = vld [vmem:[#allocation11] sm:$0xff]
    %v655 = vld [vmem:[#allocation11 + $0x8] sm:$0xff]
    %v656 = vld [vmem:[#allocation11 + $0x10] sm:$0xff]
    %v657 = vld [vmem:[#allocation11 + $0x18] sm:$0xff]
    %vm658 = vcmask 130048
    %v660 = vsel %vm658, %v648, 0
    %662 = vmatprep.subr.mxu0 %v651
    %663 = vmatpush1.msra.mxu0 %v650
    %664 = vmatprep.subr.mxu0 %v653
    %665 = vmatpush1.msra.mxu0 %v652
    %666 = vmatprep.subr.mxu0 0.0
    %667 = vmatpush1.msra.mxu0 0.0
    %668 = vmatprep.subr.mxu0 0.0
    %669 = vmatpush1.msra.mxu0 0.0
    %670 = vmatprep.subr.mxu0 0.0
    %671 = vmatpush1.msra.mxu0 0.0
    %672 = vmatprep.subr.mxu0 0.0
    %673 = vmatpush1.msra.mxu0 0.0
    %674 = vmatprep.subr.mxu0 0.0
    %675 = vmatpush1.msra.mxu0 0.0
    %676 = vmatprep.subr.mxu0 0.0
    %677 = vmatpush1.msra.mxu0 0.0
    %678 = vmatprep.subr.mxu0 0.0
    %679 = vmatpush1.msra.mxu0 0.0
    %680 = vmatprep.subr.mxu0 0.0
    %681 = vmatpush1.msra.mxu0 0.0
    %682 = vmatprep.subr.mxu0 0.0
    %683 = vmatpush1.msra.mxu0 0.0
    %684 = vmatprep.subr.mxu0 0.0
    %685 = vmatpush1.msra.mxu0 0.0
    %686 = vmatprep.subr.mxu0 0.0
    %687 = vmatpush1.msra.mxu0 0.0
    %688 = vmatprep.subr.mxu0 0.0
    %689 = vmatpush1.msra.mxu0 0.0
    %690 = vmatprep.subr.mxu0 0.0
    %691 = vmatpush1.msra.mxu0 0.0
    %692 = vmatprep.subr.mxu0 0.0
    %693 = vmatpush1.msra.mxu0 0.0
    %694 = vmatprep.subr.mxu0 0.0
    %695 = vmatpush1.msra.mxu0 0.0
    %696 = vmatprep.subr.mxu0 0.0
    %697 = vmatpush1.msra.mxu0 0.0
    %698 = vmatprep.subr.mxu0 0.0
    %699 = vmatpush1.msra.mxu0 0.0
    %700 = vmatprep.subr.mxu0 0.0
    %701 = vmatpush1.msra.mxu0 0.0
    %702 = vmatprep.subr.mxu0 0.0
    %703 = vmatpush1.msra.mxu0 0.0
    %704 = vmatprep.subr.mxu0 0.0
    %705 = vmatpush1.msra.mxu0 0.0
    %706 = vmatprep.subr.mxu0 0.0
    %707 = vmatpush1.msra.mxu0 0.0
    %708 = vmatprep.subr.mxu0 0.0
    %709 = vmatpush1.msra.mxu0 0.0
    %710 = vmatprep.subr.mxu0 0.0
    %711 = vmatpush1.msra.mxu0 0.0
    %712 = vmatprep.subr.mxu0 0.0
    %713 = vmatpush1.msra.mxu0 0.0
    %714 = vmatprep.subr.mxu0 0.0
    %715 = vmatpush1.msra.mxu0 0.0
    %716 = vmatprep.subr.mxu0 0.0
    %717 = vmatpush1.msra.mxu0 0.0
    %718 = vmatprep.subr.mxu0 0.0
    %719 = vmatpush1.msra.mxu0 0.0
    %720 = vmatprep.subr.mxu0 0.0
    %721 = vmatpush1.msra.mxu0 0.0
    %722 = vmatprep.subr.mxu0 0.0
    %723 = vmatpush1.msra.mxu0 0.0
    %724 = vmatprep.subr.mxu0 0.0
    %725 = vmatpush1.msra.mxu0 0.0
    %726 = vmatprep.mubr.f32.mxu0 0.0
    %727 = vmatmul.mubr.f32.gmra.mrb[0].mxu0 %v660
    %v728 = vpop.f32.mrb[0].mxu0
    %v729 = vadd.f32 0.0, %v728
    %v730 = vpop.f32.mrb[0].mxu0
    %v731 = vadd.f32 0.0, %v730
    %732 = vdwg.mxu0
    %v734 = vsel %vm658, %v649, 0
    %736 = vmatprep.subr.mxu0 %v651
    %737 = vmatpush1.msra.mxu0 %v650
    %738 = vmatprep.subr.mxu0 %v653
    %739 = vmatpush1.msra.mxu0 %v652
    %740 = vmatprep.subr.mxu0 0.0
    %741 = vmatpush1.msra.mxu0 0.0
    %742 = vmatprep.subr.mxu0 0.0
    %743 = vmatpush1.msra.mxu0 0.0
    %744 = vmatprep.subr.mxu0 0.0
    %745 = vmatpush1.msra.mxu0 0.0
    %746 = vmatprep.subr.mxu0 0.0
    %747 = vmatpush1.msra.mxu0 0.0
    %748 = vmatprep.subr.mxu0 0.0
    %749 = vmatpush1.msra.mxu0 0.0
    %750 = vmatprep.subr.mxu0 0.0
    %751 = vmatpush1.msra.mxu0 0.0
    %752 = vmatprep.subr.mxu0 0.0
    %753 = vmatpush1.msra.mxu0 0.0
    %754 = vmatprep.subr.mxu0 0.0
    %755 = vmatpush1.msra.mxu0 0.0
    %756 = vmatprep.subr.mxu0 0.0
    %757 = vmatpush1.msra.mxu0 0.0
    %758 = vmatprep.subr.mxu0 0.0
    %759 = vmatpush1.msra.mxu0 0.0
    %760 = vmatprep.subr.mxu0 0.0
    %761 = vmatpush1.msra.mxu0 0.0
    %762 = vmatprep.subr.mxu0 0.0
    %763 = vmatpush1.msra.mxu0 0.0
    %764 = vmatprep.subr.mxu0 0.0
    %765 = vmatpush1.msra.mxu0 0.0
    %766 = vmatprep.subr.mxu0 0.0
    %767 = vmatpush1.msra.mxu0 0.0
    %768 = vmatprep.subr.mxu0 0.0
    %769 = vmatpush1.msra.mxu0 0.0
    %770 = vmatprep.subr.mxu0 0.0
    %771 = vmatpush1.msra.mxu0 0.0
    %772 = vmatprep.subr.mxu0 0.0
    %773 = vmatpush1.msra.mxu0 0.0
    %774 = vmatprep.subr.mxu0 0.0
    %775 = vmatpush1.msra.mxu0 0.0
    %776 = vmatprep.subr.mxu0 0.0
    %777 = vmatpush1.msra.mxu0 0.0
    %778 = vmatprep.subr.mxu0 0.0
    %779 = vmatpush1.msra.mxu0 0.0
    %780 = vmatprep.subr.mxu0 0.0
    %781 = vmatpush1.msra.mxu0 0.0
    %782 = vmatprep.subr.mxu0 0.0
    %783 = vmatpush1.msra.mxu0 0.0
    %784 = vmatprep.subr.mxu0 0.0
    %785 = vmatpush1.msra.mxu0 0.0
    %786 = vmatprep.subr.mxu0 0.0
    %787 = vmatpush1.msra.mxu0 0.0
    %788 = vmatprep.subr.mxu0 0.0
    %789 = vmatpush1.msra.mxu0 0.0
    %790 = vmatprep.subr.mxu0 0.0
    %791 = vmatpush1.msra.mxu0 0.0
    %792 = vmatprep.subr.mxu0 0.0
    %793 = vmatpush1.msra.mxu0 0.0
    %794 = vmatprep.subr.mxu0 0.0
    %795 = vmatpush1.msra.mxu0 0.0
    %796 = vmatprep.subr.mxu0 0.0
    %797 = vmatpush1.msra.mxu0 0.0
    %798 = vmatprep.subr.mxu0 0.0
    %799 = vmatpush1.msra.mxu0 0.0
    %800 = vmatprep.mubr.f32.mxu0 0.0
    %801 = vmatmul.mubr.f32.gmra.mrb[0].mxu0 %v734
    %v802 = vpop.f32.mrb[0].mxu0
    %v803 = vadd.f32 0.0, %v802
    %v804 = vpop.f32.mrb[0].mxu0
    %v805 = vadd.f32 0.0, %v804
    %806 = vdwg.mxu0
    %807 = vmatprep.subr.mxu0 %v655
    %808 = vmatpush1.msra.mxu0 %v654
    %809 = vmatprep.subr.mxu0 %v657
    %810 = vmatpush1.msra.mxu0 %v656
    %811 = vmatprep.subr.mxu0 0.0
    %812 = vmatpush1.msra.mxu0 0.0
    %813 = vmatprep.subr.mxu0 0.0
    %814 = vmatpush1.msra.mxu0 0.0
    %815 = vmatprep.subr.mxu0 0.0
    %816 = vmatpush1.msra.mxu0 0.0
    %817 = vmatprep.subr.mxu0 0.0
    %818 = vmatpush1.msra.mxu0 0.0
    %819 = vmatprep.subr.mxu0 0.0
    %820 = vmatpush1.msra.mxu0 0.0
    %821 = vmatprep.subr.mxu0 0.0
    %822 = vmatpush1.msra.mxu0 0.0
    %823 = vmatprep.subr.mxu0 0.0
    %824 = vmatpush1.msra.mxu0 0.0
    %825 = vmatprep.subr.mxu0 0.0
    %826 = vmatpush1.msra.mxu0 0.0
    %827 = vmatprep.subr.mxu0 0.0
    %828 = vmatpush1.msra.mxu0 0.0
    %829 = vmatprep.subr.mxu0 0.0
    %830 = vmatpush1.msra.mxu0 0.0
    %831 = vmatprep.subr.mxu0 0.0
    %832 = vmatpush1.msra.mxu0 0.0
    %833 = vmatprep.subr.mxu0 0.0
    %834 = vmatpush1.msra.mxu0 0.0
    %835 = vmatprep.subr.mxu0 0.0
    %836 = vmatpush1.msra.mxu0 0.0
    %837 = vmatprep.subr.mxu0 0.0
    %838 = vmatpush1.msra.mxu0 0.0
    %839 = vmatprep.subr.mxu0 0.0
    %840 = vmatpush1.msra.mxu0 0.0
    %841 = vmatprep.subr.mxu0 0.0
    %842 = vmatpush1.msra.mxu0 0.0
    %843 = vmatprep.subr.mxu0 0.0
    %844 = vmatpush1.msra.mxu0 0.0
    %845 = vmatprep.subr.mxu0 0.0
    %846 = vmatpush1.msra.mxu0 0.0
    %847 = vmatprep.subr.mxu0 0.0
    %848 = vmatpush1.msra.mxu0 0.0
    %849 = vmatprep.subr.mxu0 0.0
    %850 = vmatpush1.msra.mxu0 0.0
    %851 = vmatprep.subr.mxu0 0.0
    %852 = vmatpush1.msra.mxu0 0.0
    %853 = vmatprep.subr.mxu0 0.0
    %854 = vmatpush1.msra.mxu0 0.0
    %855 = vmatprep.subr.mxu0 0.0
    %856 = vmatpush1.msra.mxu0 0.0
    %857 = vmatprep.subr.mxu0 0.0
    %858 = vmatpush1.msra.mxu0 0.0
    %859 = vmatprep.subr.mxu0 0.0
    %860 = vmatpush1.msra.mxu0 0.0
    %861 = vmatprep.subr.mxu0 0.0
    %862 = vmatpush1.msra.mxu0 0.0
    %863 = vmatprep.subr.mxu0 0.0
    %864 = vmatpush1.msra.mxu0 0.0
    %865 = vmatprep.subr.mxu0 0.0
    %866 = vmatpush1.msra.mxu0 0.0
    %867 = vmatprep.subr.mxu0 0.0
    %868 = vmatpush1.msra.mxu0 0.0
    %869 = vmatprep.subr.mxu0 0.0
    %870 = vmatpush1.msra.mxu0 0.0
    %871 = vmatprep.mubr.f32.mxu0 0.0
    %872 = vmatmul.mubr.f32.gmra.mrb[0].mxu0 %v660
    %v873 = vpop.f32.mrb[0].mxu0
    %v874 = vadd.f32 0.0, %v873
    %v875 = vpop.f32.mrb[0].mxu0
    %v876 = vadd.f32 0.0, %v875
    %877 = vdwg.mxu0
    %878 = vmatprep.subr.mxu0 %v655
    %879 = vmatpush1.msra.mxu0 %v654
    %880 = vmatprep.subr.mxu0 %v657
    %881 = vmatpush1.msra.mxu0 %v656
    %882 = vmatprep.subr.mxu0 0.0
    %883 = vmatpush1.msra.mxu0 0.0
    %884 = vmatprep.subr.mxu0 0.0
    %885 = vmatpush1.msra.mxu0 0.0
    %886 = vmatprep.subr.mxu0 0.0
    %887 = vmatpush1.msra.mxu0 0.0
    %888 = vmatprep.subr.mxu0 0.0
    %889 = vmatpush1.msra.mxu0 0.0
    %890 = vmatprep.subr.mxu0 0.0
    %891 = vmatpush1.msra.mxu0 0.0
    %892 = vmatprep.subr.mxu0 0.0
    %893 = vmatpush1.msra.mxu0 0.0
    %894 = vmatprep.subr.mxu0 0.0
    %895 = vmatpush1.msra.mxu0 0.0
    %896 = vmatprep.subr.mxu0 0.0
    %897 = vmatpush1.msra.mxu0 0.0
    %898 = vmatprep.subr.mxu0 0.0
    %899 = vmatpush1.msra.mxu0 0.0
    %900 = vmatprep.subr.mxu0 0.0
    %901 = vmatpush1.msra.mxu0 0.0
    %902 = vmatprep.subr.mxu0 0.0
    %903 = vmatpush1.msra.mxu0 0.0
    %904 = vmatprep.subr.mxu0 0.0
    %905 = vmatpush1.msra.mxu0 0.0
    %906 = vmatprep.subr.mxu0 0.0
    %907 = vmatpush1.msra.mxu0 0.0
    %908 = vmatprep.subr.mxu0 0.0
    %909 = vmatpush1.msra.mxu0 0.0
    %910 = vmatprep.subr.mxu0 0.0
    %911 = vmatpush1.msra.mxu0 0.0
    %912 = vmatprep.subr.mxu0 0.0
    %913 = vmatpush1.msra.mxu0 0.0
    %914 = vmatprep.subr.mxu0 0.0
    %915 = vmatpush1.msra.mxu0 0.0
    %916 = vmatprep.subr.mxu0 0.0
    %917 = vmatpush1.msra.mxu0 0.0
    %918 = vmatprep.subr.mxu0 0.0
    %919 = vmatpush1.msra.mxu0 0.0
    %920 = vmatprep.subr.mxu0 0.0
    %921 = vmatpush1.msra.mxu0 0.0
    %922 = vmatprep.subr.mxu0 0.0
    %923 = vmatpush1.msra.mxu0 0.0
    %924 = vmatprep.subr.mxu0 0.0
    %925 = vmatpush1.msra.mxu0 0.0
    %926 = vmatprep.subr.mxu0 0.0
    %927 = vmatpush1.msra.mxu0 0.0
    %928 = vmatprep.subr.mxu0 0.0
    %929 = vmatpush1.msra.mxu0 0.0
    %930 = vmatprep.subr.mxu0 0.0
    %931 = vmatpush1.msra.mxu0 0.0
    %932 = vmatprep.subr.mxu0 0.0
    %933 = vmatpush1.msra.mxu0 0.0
    %934 = vmatprep.subr.mxu0 0.0
    %935 = vmatpush1.msra.mxu0 0.0
    %936 = vmatprep.subr.mxu0 0.0
    %937 = vmatpush1.msra.mxu0 0.0
    %938 = vmatprep.subr.mxu0 0.0
    %939 = vmatpush1.msra.mxu0 0.0
    %940 = vmatprep.subr.mxu0 0.0
    %941 = vmatpush1.msra.mxu0 0.0
    %942 = vmatprep.mubr.f32.mxu0 0.0
    %943 = vmatmul.mubr.f32.gmra.mrb[0].mxu0 %v734
    %v944 = vpop.f32.mrb[0].mxu0
    %v945 = vadd.f32 0.0, %v944
    %v946 = vpop.f32.mrb[0].mxu0
    %v947 = vadd.f32 0.0, %v946
    %948 = vdwg.mxu0
    %v949 = vmul.f32 %v729, %v431
    %v950 = vmul.f32 %v731, %v433
    %v951 = vmul.f32 %v803, %v502
    %v952 = vmul.f32 %v805, %v504
    %v953 = vadd.f32 %v949, %v951
    %v954 = vadd.f32 %v950, %v952
    %v955 = vmul.f32 %v729, %v573
    %v956 = vmul.f32 %v731, %v575
    %v957 = vmul.f32 %v803, %v644
    %v958 = vmul.f32 %v805, %v646
    %v959 = vadd.f32 %v955, %v957
    %v960 = vadd.f32 %v956, %v958
    %v961 = vmul.f32 %v874, %v953
    %v962 = vmul.f32 %v876, %v954
    %v963 = vmul.f32 %v945, %v959
    %v964 = vmul.f32 %v947, %v960
    %v965 = vadd.f32 %v961, %v963
    %v966 = vadd.f32 %v962, %v964
    %v967 = vld [vmem:[%s6] sm:$0x3]
    %v969 = vlaneseq
    %v970 = vshrl.u32 %v969, 7
    %v971 = vsub.s32 0, %v970
    %v972 = vrot.slane %v967, %v971
    %v973 = vlaneseq
    %v974 = vshrl.u32 %v973, 7
    %v975 = vsub.s32 1, %v974
    %v976 = vrot.slane %v967, %v975
    %v979 = vmul.f32 %v106, %v972
    %v980 = vmul.f32 %v107, %v976
    %v981 = vadd.f32 %v979, %v980
    %982 = vadd.xlane.f32.xlu0 %v981
    %v983 = vpop.xlane.xlu0 %982
    %v984 = vld [vmem:[%s7] sm:$0x3]
    %v986 = vlaneseq
    %v987 = vshrl.u32 %v986, 7
    %v988 = vsub.s32 0, %v987
    %v989 = vrot.slane %v984, %v988
    %v990 = vlaneseq
    %v991 = vshrl.u32 %v990, 7
    %v992 = vsub.s32 1, %v991
    %v993 = vrot.slane %v984, %v992
    %v996 = vmul.f32 %v983, %v989
    %v997 = vmul.f32 %v983, %v993
    %v998 = vadd.f32 %v965, %v996
    %v999 = vadd.f32 %v966, %v997
    %1000 = vst [vmem:[#allocation13] sm:$0xff] %v998
    %1001 = vst [vmem:[#allocation13 + $0x8] sm:$0xff] %v999
    // Predicated region
    $region58: #{tpu_custom_call.1} parent=1 // pred_check
      _
    $region59: #{tpu_custom_call.1} parent=1 // pred_check_branch
      %1003 = sbr.rel (0) target = $region61
    $region60: #{tpu_custom_call.1} parent=1 // pred_region
      %s1005 = ssub.s32 256, 256
      %1006 = vsyncadd [#allocation4], %s1005
      %s1008 = sshll.u32 [#allocation13], 4
      %s1009 = int_to_ptr.vmem [resolvable:$true] %s1008
      %1011 = dma.vmem_to_hbm [thread:$0]  %s1009, 256, %s8, [#allocation4]
    $region61: #{tpu_custom_call.1} parent=1 // pred_fallthru
      _
    // Predicated region
    $region62: #{tpu_custom_call.1} parent=1 // pred_check
      _
    $region63: #{tpu_custom_call.1} parent=1 // pred_check_branch
      %1013 = sbr.rel (0) target = $region65
    $region64: #{tpu_custom_call.1} parent=1 // pred_region
      %1014 = dma.done [#allocation4], 256
    $region65: #{tpu_custom_call.1} parent=1 // pred_fallthru
      _
    %1015 = vsyncpa [#allocation3], 1
    %1016 = vsyncpa [#allocation6], 1
    %1017 = vsyncpa [#allocation9], 1
    %1018 = vsyncpa [#allocation12], 1
    %1019 = vsyncpa [#allocation4], 1

</llo_original>
